<compile_context>
chip_gen: v7x
topology: tpu7x:2x2x1
jax: 0.10.0
libtpu: 0.0.40
codegen_flags: <defaults>
</compile_context>

<pallas_src>
import jax
import jax.numpy as jnp
from jax.experimental import pallas as pl
from jax.experimental.pallas import tpu as pltpu

_LANE = 128   # lane width (last dim of every vreg tile)
_SUBLANE = 8  # sublane granularity for f32


def _prog_error_kernel(scalars_ref, one_cnt_ref, in_raw_ref, out_pp_ref, err_ref):
    # scalars_ref (SMEM): [mul, add, inv_scale]
    #   unipolar: mul = 1/len, add = 0 ; bipolar: mul = 2/len, add = -1
    mul = scalars_ref[0]
    add = scalars_ref[1]
    inv_scale = scalars_ref[2]

    pp = one_cnt_ref[...] * mul + add
    # Fused __init__ glue: iv = clamp(in_value_raw / scale, -1, 1).
    # NOTE: the reference clamps to [-1, 1] regardless of mode; kept as-is.
    iv = jnp.clip(in_raw_ref[...] * inv_scale, -1.0, 1.0)

    out_pp_ref[...] = pp
    # Relative progressive error; inf/NaN when iv == 0 (matches PyTorch reference).
    err_ref[...] = jnp.abs((pp - iv) / iv)


def _choose_tile(rows, cap):
    """rows is a multiple of 8; pick a sublane-aligned row tile <= cap with >=2 grid steps."""
    if rows <= _SUBLANE:
        return _SUBLANE                       # can't split a single sublane-row
    if rows <= cap:
        target_steps = 4 if rows >= 4 * _SUBLANE else 2
        tile_r = -(-rows // target_steps)     # ceil divide
        tile_r = -(-tile_r // _SUBLANE) * _SUBLANE
        return max(_SUBLANE, tile_r)
    return cap


def prog_error_forward(one_cnt, stream_len, in_value_raw, *, scale=1.0,
                       mode="bipolar"):
    """Pallas implementation of ProgError.forward().

    one_cnt:      f32 [B, C, H, W]  accumulated ones from Monitor()
    stream_len:   f32 scalar/[1]    accumulated stream length from Monitor()
    in_value_raw: f32 [B, C, H, W]  target value (before /scale and clamp)
    """
    assert mode in ("unipolar", "bipolar"), "ProgError mode is not implemented."

    one_cnt = jnp.asarray(one_cnt, jnp.float32)
    in_raw = jnp.asarray(in_value_raw, jnp.float32)
    orig_shape = in_raw.shape
    n = in_raw.size

    # Generation-aware tile cap: 8192 rows (4 MiB blocks) on 128-MiB-VMEM chips
    # (v5e/v6e), 4096 rows (2 MiB blocks) on 64-MiB-VMEM chips (v7x).
    try:
        vmem_bytes = int(pltpu.get_tpu_info().vmem_capacity_bytes)
    except Exception:  # conservative default if the query is unavailable
        vmem_bytes = 64 * 1024 * 1024
    cap = 8192 if vmem_bytes >= 128 * 1024 * 1024 else 4096

    align = _SUBLANE * _LANE
    aligned = (n % align == 0)
    if aligned:
        # Common NCHW case: pure reshape, no pad copy, no output slice.
        rows = n // _LANE
        one_2d = one_cnt.reshape(rows, _LANE)
        in_2d = in_raw.reshape(rows, _LANE)
    else:
        # Ragged tail: pad only to 8*128 alignment (tiny); pad in_value with 1.0
        # so padded lanes stay finite, results are sliced off below.
        n_pad = pl.cdiv(n, align) * align
        rows = n_pad // _LANE
        one_2d = jnp.pad(one_cnt.reshape(-1), (0, n_pad - n)).reshape(rows, _LANE)
        in_2d = jnp.pad(in_raw.reshape(-1), (0, n_pad - n),
                        constant_values=1.0).reshape(rows, _LANE)

    tile_r = _choose_tile(rows, cap)
    grid = pl.cdiv(rows, tile_r)

    # 2 inputs + 2 outputs, double-buffered, plus margin for compiler internals.
    block_bytes = tile_r * _LANE * 4
    vmem_limit = max(4 * 2 * block_bytes + (8 << 20), 16 << 20)

    # Fold the stream-length division and the bipolar rescale into scalars.
    len_scalar = jnp.asarray(stream_len, jnp.float32).reshape(-1)[0]
    inv_len = 1.0 / len_scalar
    if mode == "bipolar":
        mul, add = 2.0 * inv_len, jnp.float32(-1.0)
    else:
        mul, add = inv_len, jnp.float32(0.0)
    inv_scale = jnp.float32(1.0) / jnp.asarray(scale, jnp.float32)
    scalars = jnp.stack([mul, add, inv_scale]).astype(jnp.float32)

    slab_shape = (rows, _LANE)
    out_pp_2d, err_2d = pl.pallas_call(
        _prog_error_kernel,
        out_shape=(
            jax.ShapeDtypeStruct(slab_shape, jnp.float32),
            jax.ShapeDtypeStruct(slab_shape, jnp.float32),
        ),
        grid=(grid,),
        in_specs=[
            pl.BlockSpec(memory_space=pltpu.MemorySpace.SMEM),   # [mul, add, 1/scale]
            pl.BlockSpec((tile_r, _LANE), lambda i: (i, 0)),     # one_cnt tile
            pl.BlockSpec((tile_r, _LANE), lambda i: (i, 0)),     # raw in_value tile
        ],
        out_specs=(
            pl.BlockSpec((tile_r, _LANE), lambda i: (i, 0)),     # out_pp tile
            pl.BlockSpec((tile_r, _LANE), lambda i: (i, 0)),     # err tile
        ),
        compiler_params=pltpu.CompilerParams(
            dimension_semantics=("parallel",),   # independent rows -> both TCs on v7x
            vmem_limit_bytes=int(vmem_limit),
        ),
    )(scalars, one_2d, in_2d)

    if aligned:
        out_pp = out_pp_2d.reshape(orig_shape)
        err = err_2d.reshape(orig_shape)
    else:
        out_pp = out_pp_2d.reshape(-1)[:n].reshape(orig_shape)
        err = err_2d.reshape(-1)[:n].reshape(orig_shape)
    return out_pp, err


if __name__ == "__main__":
    key = jax.random.PRNGKey(0)
    k_in, k_bits = jax.random.split(key)

    B, C, H, W = 2, 4, 16, 16
    STREAM_LEN = 8.0  # number of Monitor() calls

    # Target values: keep away from zero so the relative error is finite.
    sign = jnp.where(jax.random.bernoulli(k_in, 0.5, (B, C, H, W)), 1.0, -1.0)
    mag = jax.random.uniform(k_in, (B, C, H, W), minval=0.1, maxval=0.9)
    in_value_raw = (sign * mag).astype(jnp.float32)

    # Simulated accumulated one-counts after STREAM_LEN Monitor() calls.
    one_cnt = jax.random.randint(
        k_bits, (B, C, H, W), 0, int(STREAM_LEN) + 1).astype(jnp.float32)
    stream_len = jnp.array([STREAM_LEN], dtype=jnp.float32)

    out_pp, err = prog_error_forward(
        one_cnt, stream_len, in_value_raw, scale=1.0, mode="bipolar")
    jax.block_until_ready((out_pp, err))

    # Reference check in plain JAX.
    iv = jnp.clip(in_value_raw / 1.0, -1.0, 1.0)
    pp_ref = one_cnt / STREAM_LEN * 2.0 - 1.0
    err_ref = jnp.abs((pp_ref - iv) / iv)
    assert out_pp.shape == in_value_raw.shape and err.shape == in_value_raw.shape
    assert jnp.allclose(out_pp, pp_ref, atol=1e-6, rtol=1e-6)
    assert jnp.allclose(err, err_ref, atol=1e-5, rtol=1e-5)

    print("KERNEL_OK")
</pallas_src>

<mosaic_0001>
module attributes {stable_mosaic.version = 11 : i64} {
  func.func @_prog_error_kernel(%arg0: i32, %arg1: memref<3xf32, #tpu.memory_space<smem>>, %arg2: memref<8x128xf32, #tpu.memory_space<vmem>>, %arg3: memref<8x128xf32, #tpu.memory_space<vmem>>, %arg4: memref<8x128xf32, #tpu.memory_space<vmem>>, %arg5: memref<8x128xf32, #tpu.memory_space<vmem>>) attributes {dimension_semantics = [#tpu.dimension_semantics<parallel>], iteration_bounds = array<i64: 2>, scalar_prefetch = 0 : i64, scratch_operands = 0 : i64, tpu.core_type = #tpu.core_type<tc>, window_params = [{transform_indices = @transform_0, window_bounds = array<i64: 3>}, {transform_indices = @transform_1, window_bounds = array<i64: 8, 128>}, {transform_indices = @transform_2, window_bounds = array<i64: 8, 128>}, {transform_indices = @transform_3, window_bounds = array<i64: 8, 128>}, {transform_indices = @transform_4, window_bounds = array<i64: 8, 128>}]} {
    %c0 = arith.constant 0 : index
    %0 = memref.load %arg1[%c0] : memref<3xf32, #tpu.memory_space<smem>>
    %c1 = arith.constant 1 : index
    %1 = memref.load %arg1[%c1] : memref<3xf32, #tpu.memory_space<smem>>
    %c2 = arith.constant 2 : index
    %2 = memref.load %arg1[%c2] : memref<3xf32, #tpu.memory_space<smem>>
    %c0_0 = arith.constant 0 : index
    %c0_1 = arith.constant 0 : index
    %3 = vector.load %arg2[%c0_0, %c0_1] : memref<8x128xf32, #tpu.memory_space<vmem>>, vector<8x128xf32>
    %4 = vector.broadcast %0 : f32 to vector<8x128xf32>
    %5 = arith.mulf %3, %4 : vector<8x128xf32>
    %6 = vector.broadcast %1 : f32 to vector<8x128xf32>
    %7 = arith.addf %5, %6 : vector<8x128xf32>
    %c0_2 = arith.constant 0 : index
    %c0_3 = arith.constant 0 : index
    %8 = vector.load %arg3[%c0_2, %c0_3] : memref<8x128xf32, #tpu.memory_space<vmem>>, vector<8x128xf32>
    %9 = vector.broadcast %2 : f32 to vector<8x128xf32>
    %10 = arith.mulf %8, %9 : vector<8x128xf32>
    %cst = arith.constant -1.000000e+00 : f32
    %cst_4 = arith.constant 1.000000e+00 : f32
    %11 = vector.broadcast %cst : f32 to vector<8x128xf32>
    %12 = arith.maximumf %11, %10 : vector<8x128xf32>
    %13 = vector.broadcast %cst_4 : f32 to vector<8x128xf32>
    %14 = arith.minimumf %13, %12 : vector<8x128xf32>
    %c0_5 = arith.constant 0 : index
    %c0_6 = arith.constant 0 : index
    %15 = vector.load %arg4[%c0_5, %c0_6] : memref<8x128xf32, #tpu.memory_space<vmem>>, vector<8x128xf32>
    tpu.vector_store %arg4[%c0_5, %c0_6], %7 {strides = array<i32>} : memref<8x128xf32, #tpu.memory_space<vmem>>, vector<8x128xf32>,
    %16 = arith.subf %7, %14 : vector<8x128xf32>
    %17 = arith.divf %16, %14 : vector<8x128xf32>
    %18 = math.absf %17 : vector<8x128xf32>
    %c0_7 = arith.constant 0 : index
    %c0_8 = arith.constant 0 : index
    %19 = vector.load %arg5[%c0_7, %c0_8] : memref<8x128xf32, #tpu.memory_space<vmem>>, vector<8x128xf32>
    tpu.vector_store %arg5[%c0_7, %c0_8], %18 {strides = array<i32>} : memref<8x128xf32, #tpu.memory_space<vmem>>, vector<8x128xf32>,
    return
  }
  func.func @transform_0(%arg0: i32) -> i32 {
    %c0_i32 = arith.constant 0 : i32
    %c0_i32_0 = arith.constant 0 : i32
    return %c0_i32 : i32
  }
  func.func @transform_1(%arg0: i32) -> (i32, i32) {
    %c0_i32 = arith.constant 0 : i32
    %c0_i32_0 = arith.constant 0 : i32
    return %arg0, %c0_i32 : i32, i32
  }
  func.func @transform_2(%arg0: i32) -> (i32, i32) {
    %c0_i32 = arith.constant 0 : i32
    %c0_i32_0 = arith.constant 0 : i32
    return %arg0, %c0_i32 : i32, i32
  }
  func.func @transform_3(%arg0: i32) -> (i32, i32) {
    %c0_i32 = arith.constant 0 : i32
    %c0_i32_0 = arith.constant 0 : i32
    return %arg0, %c0_i32 : i32, i32
  }
  func.func @transform_4(%arg0: i32) -> (i32, i32) {
    %c0_i32 = arith.constant 0 : i32
    %c0_i32_0 = arith.constant 0 : i32
    return %arg0, %c0_i32 : i32, i32
  }
}

</mosaic_0001>

<llo_original>
// kernel: tpu_custom_call.1
$region0: #{tpu_custom_call.1}
  #allocation0 [shape = 'u32[]', space=smem, size = 0x4, offset = 0x4, fixed_abs, tag = 'smem constant byte address 0x4 - core index']
  #allocation1 [shape = 'u32[144,128]{1,0:T(1,128)}', space=vmem, size = 0x12000, scoped, tag = 'internal scratch']
  %s0 = inlined_call_operand.hbm [shape: f32[3], index: 0, kind: input, shape index: {}]
  %s1 = inlined_call_operand.hbm [shape: f32[16,128], index: 1, kind: input, shape index: {}]
  %s2 = inlined_call_operand.hbm [shape: f32[16,128], index: 2, kind: input, shape index: {}]
  %s3 = inlined_call_operand.hbm [shape: f32[16,128], index: 3, kind: output, shape index: {0}]
  %s4 = inlined_call_operand.hbm [shape: f32[16,128], index: 4, kind: output, shape index: {1}]
  %5 = xla_tuple %s3, %s4
  %s6 = sld [smem:[#allocation0]]
  $region65: #{tpu_custom_call.1} parent=0
    _
  %s8 = ssub.s32 1, %s6
  %s9 = scalar_select 0, %s8, %s6
  $region1: #{tpu_custom_call.1} parent=0
    #allocation2 [shape = 'u8[512]{0}', space=smem, size = 0x200, scoped, tag = 'input window, operand 0, single buffered']
    #allocation3 [shape = 's32[2]{0}', space=sflag, size = 0x8, scoped, tag = 'scoped memory for tpu_custom_call.1']
    #allocation4 [shape = 's32[2]{0}', space=sflag, size = 0x8, scoped, tag = 'scoped memory for tpu_custom_call.1']
    #allocation5 [shape = 's32[2]{0}', space=sflag, size = 0x8, scoped, tag = 'scoped memory for tpu_custom_call.1']
    #allocation6 [shape = 'u8[8192]{0}', space=vmem, size = 0x2000, scoped, tag = 'input window, operand 1']
    #allocation7 [shape = 'u8[8192]{0}', space=vmem, size = 0x2000, scoped, tag = 'input window, operand 2']
    #allocation8 [shape = 's32[2]{0}', space=sflag, size = 0x8, scoped, tag = 'scoped memory for tpu_custom_call.1']
    #allocation9 [shape = 'u8[8192]{0}', space=vmem, size = 0x2000, scoped, tag = 'output window, operand 0']
    #allocation10 [shape = 'u8[8192]{0}', space=vmem, size = 0x2000, scoped, tag = 'output window, operand 1']
    #allocation11 [shape = 's32[2]{0}', space=sflag, size = 0x8, scoped, tag = 'scoped memory for tpu_custom_call.1']
    %10 = vsyncpa [#allocation5], 0
    %11 = vsyncpa [#allocation3], 0
    %s12 = scalar_lea.sflag [#allocation3], 1
    %13 = vsyncpa %s12, 0
    %14 = vsyncpa [#allocation8], 0
    %s15 = scalar_lea.sflag [#allocation8], 1
    %16 = vsyncpa %s15, 0
    %17 = vsyncpa [#allocation4], 0
    %s18 = scalar_lea.sflag [#allocation4], 1
    %19 = vsyncpa %s18, 0
    %20 = vsyncpa [#allocation11], 0
    %s21 = scalar_lea.sflag [#allocation11], 1
    %22 = vsyncpa %s21, 0
    loop: start=0, step=1, limit=4
    $region2: #{tpu_custom_call.1} parent=1 // loop_pre_header
      _
    $region3: #{tpu_custom_call.1} parent=1 // loop_header
      %s24 = sphi 0, %s28
      %p25 = scmp.ge.s32.totalorder %s24, 4
      %s32 = sphi 0, %s32
      %s34 = sphi 0, %s32
      %s35 = sphi 0, %s34
      %s49 = sphi 0, %s35
      %s55 = sphi 0, %s57
      %s58 = sphi 0, %s55
      %s59 = sphi 0, %s58
      %s75 = sphi 0, %s59
      %s81 = sphi 0, %s83
      %s84 = sphi 0, %s81
      %s85 = sphi 0, %s84
      %s101 = sphi 0, %s85
      %s107 = sphi 0, %s109
      %s110 = sphi 0, %s107
      %s111 = sphi 0, %s110
      %s127 = sphi 0, %s111
      %s133 = sphi 0, %s135
      %s136 = sphi 0, %s133
      %s137 = sphi 0, %s136
      %s153 = sphi 0, %s137
    $region4: #{tpu_custom_call.1} parent=1 // loop_header_branch
      %27 = sbr.rel (%p25) target = $region8
    $region5: #{tpu_custom_call.1} parent=1 // loop_body
      %s29 = ssub.s32 %s24, 1
      %s30 = ssub.s32 %s24, 2
      %s31 = sadd.s32 %s24, 1
      %s33 = sadd.s32 %s32, 1
      %p36 = scmp.eq.s32.totalorder %s24, 1
      %p37 = scmp.ne.s32.totalorder %s32, %s34
      %p38 = scmp.eq.s32.totalorder %s24, 0
      %p39 = por %p37, %p38
      %p40 = scmp.ne.s32.totalorder %s32, %s34
      %p41 = scmp.eq.s32.totalorder %s29, 1
      %p42 = por %p40, %p41
      %p43 = scmp.ne.s32.totalorder %s34, %s35
      %p44 = scmp.eq.s32.totalorder %s29, 0
      %p45 = por %p43, %p44
      %p46 = scmp.ne.s32.totalorder %s34, %s35
      %p47 = scmp.eq.s32.totalorder %s30, 1
      %p48 = por %p46, %p47
      %p50 = scmp.ne.s32.totalorder %s35, %s49
      %p51 = scmp.eq.s32.totalorder %s30, 0
      %p52 = por %p50, %p51
      %s53 = ssub.s32 %s24, %s31
      %p54 = scmp.eq.s32.totalorder %s53, 0
      %s56 = sadd.s32 %s55, 1
      %s57 = scalar_select %p54, %s55, %s56
      %p60 = pneg %p54
      %p61 = scmp.eq.s32.totalorder %s24, 1
      %p62 = por %p60, %p61
      %p63 = scmp.ne.s32.totalorder %s55, %s58
      %p64 = scmp.eq.s32.totalorder %s24, 0
      %p65 = por %p63, %p64
      %p66 = scmp.ne.s32.totalorder %s55, %s58
      %p67 = scmp.eq.s32.totalorder %s29, 1
      %p68 = por %p66, %p67
      %p69 = scmp.ne.s32.totalorder %s58, %s59
      %p70 = scmp.eq.s32.totalorder %s29, 0
      %p71 = por %p69, %p70
      %p72 = scmp.ne.s32.totalorder %s58, %s59
      %p73 = scmp.eq.s32.totalorder %s30, 1
      %p74 = por %p72, %p73
      %p76 = scmp.ne.s32.totalorder %s59, %s75
      %p77 = scmp.eq.s32.totalorder %s30, 0
      %p78 = por %p76, %p77
      %s79 = ssub.s32 %s24, %s31
      %p80 = scmp.eq.s32.totalorder %s79, 0
      %s82 = sadd.s32 %s81, 1
      %s83 = scalar_select %p80, %s81, %s82
      %p86 = pneg %p80
      %p87 = scmp.eq.s32.totalorder %s24, 1
      %p88 = por %p86, %p87
      %p89 = scmp.ne.s32.totalorder %s81, %s84
      %p90 = scmp.eq.s32.totalorder %s24, 0
      %p91 = por %p89, %p90
      %p92 = scmp.ne.s32.totalorder %s81, %s84
      %p93 = scmp.eq.s32.totalorder %s29, 1
      %p94 = por %p92, %p93
      %p95 = scmp.ne.s32.totalorder %s84, %s85
      %p96 = scmp.eq.s32.totalorder %s29, 0
      %p97 = por %p95, %p96
      %p98 = scmp.ne.s32.totalorder %s84, %s85
      %p99 = scmp.eq.s32.totalorder %s30, 1
      %p100 = por %p98, %p99
      %p102 = scmp.ne.s32.totalorder %s85, %s101
      %p103 = scmp.eq.s32.totalorder %s30, 0
      %p104 = por %p102, %p103
      %s105 = ssub.s32 %s24, %s31
      %p106 = scmp.eq.s32.totalorder %s105, 0
      %s108 = sadd.s32 %s107, 1
      %s109 = scalar_select %p106, %s107, %s108
      %p112 = pneg %p106
      %p113 = scmp.eq.s32.totalorder %s24, 1
      %p114 = por %p112, %p113
      %p115 = scmp.ne.s32.totalorder %s107, %s110
      %p116 = scmp.eq.s32.totalorder %s24, 0
      %p117 = por %p115, %p116
      %p118 = scmp.ne.s32.totalorder %s107, %s110
      %p119 = scmp.eq.s32.totalorder %s29, 1
      %p120 = por %p118, %p119
      %p121 = scmp.ne.s32.totalorder %s110, %s111
      %p122 = scmp.eq.s32.totalorder %s29, 0
      %p123 = por %p121, %p122
      %p124 = scmp.ne.s32.totalorder %s110, %s111
      %p125 = scmp.eq.s32.totalorder %s30, 1
      %p126 = por %p124, %p125
      %p128 = scmp.ne.s32.totalorder %s111, %s127
      %p129 = scmp.eq.s32.totalorder %s30, 0
      %p130 = por %p128, %p129
      %s131 = ssub.s32 %s24, %s31
      %p132 = scmp.eq.s32.totalorder %s131, 0
      %s134 = sadd.s32 %s133, 1
      %s135 = scalar_select %p132, %s133, %s134
      %p138 = pneg %p132
      %p139 = scmp.eq.s32.totalorder %s24, 1
      %p140 = por %p138, %p139
      %p141 = scmp.ne.s32.totalorder %s133, %s136
      %p142 = scmp.eq.s32.totalorder %s24, 0
      %p143 = por %p141, %p142
      %p144 = scmp.ne.s32.totalorder %s133, %s136
      %p145 = scmp.eq.s32.totalorder %s29, 1
      %p146 = por %p144, %p145
      %p147 = scmp.ne.s32.totalorder %s136, %s137
      %p148 = scmp.eq.s32.totalorder %s29, 0
      %p149 = por %p147, %p148
      %p150 = scmp.ne.s32.totalorder %s136, %s137
      %p151 = scmp.eq.s32.totalorder %s30, 1
      %p152 = por %p150, %p151
      %p154 = scmp.ne.s32.totalorder %s137, %s153
      %p155 = scmp.eq.s32.totalorder %s30, 0
      %p156 = por %p154, %p155
      %p157 = scmp.le.s32.totalorder 1, %s24
      %p158 = scmp.lt.s32.totalorder %s24, 3
      %p159 = pnand %p157, %p158
      %p160 = pneg %p159
      // Predicated region
      $region9: #{tpu_custom_call.1} parent=5 // pred_check
        _
      $region10: #{tpu_custom_call.1} parent=5 // pred_check_branch
        %162 = sbr.rel (%p159) target = $region12
      $region11: #{tpu_custom_call.1} parent=5 // pred_region
        %s163 = ssub.s32 %s24, 1
        // Predicated region
        $region13: #{tpu_custom_call.1} parent=11 // pred_check
          %p164 = pneg %p45
        $region14: #{tpu_custom_call.1} parent=11 // pred_check_branch
          %166 = sbr.rel (%p164) target = $region16
        $region15: #{tpu_custom_call.1} parent=11 // pred_region
          %s168 = ssub.s32 16, 16
          %169 = vsyncadd [#allocation5], %s168
          %172 = dma.hbm_to_smem %s0, 16, [#allocation2], [#allocation5]
        $region16: #{tpu_custom_call.1} parent=11 // pred_fallthru
          _
      $region12: #{tpu_custom_call.1} parent=5 // pred_fallthru
        _
      %p173 = scmp.lt.s32.totalorder %s24, 2
      // Predicated region
      $region17: #{tpu_custom_call.1} parent=5 // pred_check
        %p174 = pneg %p173
      $region18: #{tpu_custom_call.1} parent=5 // pred_check_branch
        %176 = sbr.rel (%p174) target = $region20
      $region19: #{tpu_custom_call.1} parent=5 // pred_region
        // Predicated region
        $region21: #{tpu_custom_call.1} parent=19 // pred_check
          %p177 = pneg %p65
        $region22: #{tpu_custom_call.1} parent=19 // pred_check_branch
          %179 = sbr.rel (%p177) target = $region24
        $region23: #{tpu_custom_call.1} parent=19 // pred_region
          %s180 = sand.u32 %s55, 1
          %s181 = scalar_lea.sflag [#allocation3], %s180
          %s182 = sand.u32 %s55, 1
          %s183 = smul.addr %s182, 8
          %s184 = scalar_lea.vmem [#allocation6], %s183
          %s186 = ssub.s32 128, 128
          %187 = vsyncadd %s181, %s186
          %s188 = smul.addr %s24, 128
          %s189 = scalar_lea.hbm %s1, %s188
          %s191 = sshll.u32 %s184, 4
          %s192 = int_to_ptr.vmem [resolvable:$true] %s191
          %194 = dma.hbm_to_vmem [thread:$0]  %s189, 128, %s192, %s181
        $region24: #{tpu_custom_call.1} parent=19 // pred_fallthru
          _
        // Predicated region
        $region25: #{tpu_custom_call.1} parent=19 // pred_check
          %p195 = pneg %p91
        $region26: #{tpu_custom_call.1} parent=19 // pred_check_branch
          %197 = sbr.rel (%p195) target = $region28
        $region27: #{tpu_custom_call.1} parent=19 // pred_region
          %s198 = sand.u32 %s81, 1
          %s199 = scalar_lea.sflag [#allocation8], %s198
          %s200 = sand.u32 %s81, 1
          %s201 = smul.addr %s200, 8
          %s202 = scalar_lea.vmem [#allocation7], %s201
          %s204 = ssub.s32 128, 128
          %205 = vsyncadd %s199, %s204
          %s206 = smul.addr %s24, 128
          %s207 = scalar_lea.hbm %s2, %s206
          %s209 = sshll.u32 %s202, 4
          %s210 = int_to_ptr.vmem [resolvable:$true] %s209
          %212 = dma.hbm_to_vmem [thread:$0]  %s207, 128, %s210, %s199
        $region28: #{tpu_custom_call.1} parent=19 // pred_fallthru
          _
      $region20: #{tpu_custom_call.1} parent=5 // pred_fallthru
        _
      %p213 = scmp.le.s32.totalorder 1, %s24
      %p214 = scmp.lt.s32.totalorder %s24, 3
      %p215 = pnand %p213, %p214
      %p216 = pneg %p215
      // Predicated region
      $region29: #{tpu_custom_call.1} parent=5 // pred_check
        _
      $region30: #{tpu_custom_call.1} parent=5 // pred_check_branch
        %218 = sbr.rel (%p215) target = $region32
      $region31: #{tpu_custom_call.1} parent=5 // pred_region
        %s219 = ssub.s32 %s24, 1
        // Predicated region
        $region33: #{tpu_custom_call.1} parent=31 // pred_check
          %p220 = pneg %p45
        $region34: #{tpu_custom_call.1} parent=31 // pred_check_branch
          %222 = sbr.rel (%p220) target = $region36
        $region35: #{tpu_custom_call.1} parent=31 // pred_region
          %223 = dma.done [#allocation5], 16
        $region36: #{tpu_custom_call.1} parent=31 // pred_fallthru
          _
        %s224 = sand.u32 %s58, 1
        %s225 = scalar_lea.sflag [#allocation3], %s224
        %s226 = sand.u32 %s58, 1
        %s227 = smul.addr %s226, 8
        %s228 = scalar_lea.vmem [#allocation6], %s227
        // Predicated region
        $region37: #{tpu_custom_call.1} parent=31 // pred_check
          %p229 = pneg %p71
        $region38: #{tpu_custom_call.1} parent=31 // pred_check_branch
          %231 = sbr.rel (%p229) target = $region40
        $region39: #{tpu_custom_call.1} parent=31 // pred_region
          %232 = dma.done %s225, 128
        $region40: #{tpu_custom_call.1} parent=31 // pred_fallthru
          _
        %s233 = sand.u32 %s84, 1
        %s234 = scalar_lea.sflag [#allocation8], %s233
        %s235 = sand.u32 %s84, 1
        %s236 = smul.addr %s235, 8
        %s237 = scalar_lea.vmem [#allocation7], %s236
        // Predicated region
        $region41: #{tpu_custom_call.1} parent=31 // pred_check
          %p238 = pneg %p97
        $region42: #{tpu_custom_call.1} parent=31 // pred_check_branch
          %240 = sbr.rel (%p238) target = $region44
        $region43: #{tpu_custom_call.1} parent=31 // pred_region
          %241 = dma.done %s234, 128
        $region44: #{tpu_custom_call.1} parent=31 // pred_fallthru
          _
        %242 = sfence
        %p243 = pneg %p45
        %p244 = pneg %p42
        %s245 = sand.u32 %s58, 1
        %s246 = scalar_lea.sflag [#allocation3], %s245
        %s247 = sand.u32 %s58, 1
        %s248 = smul.addr %s247, 8
        %s249 = scalar_lea.vmem [#allocation6], %s248
        %p250 = pneg %p71
        %p251 = pneg %p68
        %s252 = sand.u32 %s84, 1
        %s253 = scalar_lea.sflag [#allocation8], %s252
        %s254 = sand.u32 %s84, 1
        %s255 = smul.addr %s254, 8
        %s256 = scalar_lea.vmem [#allocation7], %s255
        %p257 = pneg %p97
        %p258 = pneg %p94
        %p259 = pneg %p123
        %p260 = pneg %p120
        %s261 = sand.u32 %s110, 1
        %s262 = scalar_lea.sflag [#allocation4], %s261
        %s263 = sand.u32 %s110, 1
        %s264 = smul.addr %s263, 8
        %s265 = scalar_lea.vmem [#allocation9], %s264
        %p266 = pneg %p149
        %p267 = pneg %p146
        %s268 = sand.u32 %s136, 1
        %s269 = scalar_lea.sflag [#allocation11], %s268
        %s270 = sand.u32 %s136, 1
        %s271 = smul.addr %s270, 8
        %s272 = scalar_lea.vmem [#allocation10], %s271
        %s273 = sld [smem:[#allocation2]]
        %s274 = sld [smem:[#allocation2 + $0x1]]
        %s275 = sld [smem:[#allocation2 + $0x2]]
        %v276 = vld [vmem:[%s228] sm:$0xff]
        %v277 = vstv %s273
        %v278 = vmul.f32 %v276, %v277
        %v279 = vstv %s274
        %v280 = vadd.f32 %v278, %v279
        %v281 = vld [vmem:[%s237] sm:$0xff]
        %v282 = vstv %s275
        %v283 = vmul.f32 %v281, %v282
        %v284 = vmax.f32 %v283, -1.0
        %v285 = vmin.f32 %v284, 1.0
        %286 = vst [vmem:[%s265] sm:$0xff] %v280
        %v287 = vsub.f32 %v280, %v285
        %v288 = vrcp.pop %v285
        %v289 = vmul.f32 %v287, %v288
        %v290 = vand.u32 2147483647, %v289
        %291 = vst [vmem:[%s272] sm:$0xff] %v290
        %s292 = sand.u32 %s110, 1
        %s293 = scalar_lea.sflag [#allocation4], %s292
        %s294 = sand.u32 %s110, 1
        %s295 = smul.addr %s294, 8
        %s296 = scalar_lea.vmem [#allocation9], %s295
        %s297 = sand.u32 %s136, 1
        %s298 = scalar_lea.sflag [#allocation11], %s297
        %s299 = sand.u32 %s136, 1
        %s300 = smul.addr %s299, 8
        %s301 = scalar_lea.vmem [#allocation10], %s300
        // Predicated region
        $region45: #{tpu_custom_call.1} parent=31 // pred_check
          %p302 = pneg %p120
        $region46: #{tpu_custom_call.1} parent=31 // pred_check_branch
          %304 = sbr.rel (%p302) target = $region48
        $region47: #{tpu_custom_call.1} parent=31 // pred_region
          %s306 = ssub.s32 128, 128
          %307 = vsyncadd %s293, %s306
          %s308 = smul.addr %s29, 128
          %s309 = scalar_lea.hbm %s3, %s308
          %s311 = sshll.u32 %s296, 4
          %s312 = int_to_ptr.vmem [resolvable:$true] %s311
          %314 = dma.vmem_to_hbm [thread:$0]  %s312, 128, %s309, %s293
        $region48: #{tpu_custom_call.1} parent=31 // pred_fallthru
          _
        // Predicated region
        $region49: #{tpu_custom_call.1} parent=31 // pred_check
          %p315 = pneg %p146
        $region50: #{tpu_custom_call.1} parent=31 // pred_check_branch
          %317 = sbr.rel (%p315) target = $region52
        $region51: #{tpu_custom_call.1} parent=31 // pred_region
          %s319 = ssub.s32 128, 128
          %320 = vsyncadd %s298, %s319
          %s321 = smul.addr %s29, 128
          %s322 = scalar_lea.hbm %s4, %s321
          %s324 = sshll.u32 %s301, 4
          %s325 = int_to_ptr.vmem [resolvable:$true] %s324
          %327 = dma.vmem_to_hbm [thread:$0]  %s325, 128, %s322, %s298
        $region52: #{tpu_custom_call.1} parent=31 // pred_fallthru
          _
      $region32: #{tpu_custom_call.1} parent=5 // pred_fallthru
        _
      %p328 = scmp.le.s32.totalorder 2, %s24
      // Predicated region
      $region53: #{tpu_custom_call.1} parent=5 // pred_check
        %p329 = pneg %p328
      $region54: #{tpu_custom_call.1} parent=5 // pred_check_branch
        %331 = sbr.rel (%p329) target = $region56
      $region55: #{tpu_custom_call.1} parent=5 // pred_region
        %s332 = ssub.s32 %s24, 2
        // Predicated region
        $region57: #{tpu_custom_call.1} parent=55 // pred_check
          %p333 = pneg %p126
        $region58: #{tpu_custom_call.1} parent=55 // pred_check_branch
          %335 = sbr.rel (%p333) target = $region60
        $region59: #{tpu_custom_call.1} parent=55 // pred_region
          %s336 = sand.u32 %s111, 1
          %s337 = scalar_lea.sflag [#allocation4], %s336
          %s338 = sand.u32 %s111, 1
          %s339 = smul.addr %s338, 8
          %s340 = scalar_lea.vmem [#allocation9], %s339
          %341 = dma.done %s337, 128
        $region60: #{tpu_custom_call.1} parent=55 // pred_fallthru
          _
        // Predicated region
        $region61: #{tpu_custom_call.1} parent=55 // pred_check
          %p342 = pneg %p152
        $region62: #{tpu_custom_call.1} parent=55 // pred_check_branch
          %344 = sbr.rel (%p342) target = $region64
        $region63: #{tpu_custom_call.1} parent=55 // pred_region
          %s345 = sand.u32 %s137, 1
          %s346 = scalar_lea.sflag [#allocation11], %s345
          %s347 = sand.u32 %s137, 1
          %s348 = smul.addr %s347, 8
          %s349 = scalar_lea.vmem [#allocation10], %s348
          %350 = dma.done %s346, 128
        $region64: #{tpu_custom_call.1} parent=55 // pred_fallthru
          _
      $region56: #{tpu_custom_call.1} parent=5 // pred_fallthru
        _
    $region6: #{tpu_custom_call.1} parent=1 // loop_footer
      %s28 = sadd.s32 1, %s24
    $region7: #{tpu_custom_call.1} parent=1 // loop_footer_branch
      %23 = sbr.rel target = $region3
    $region8: #{tpu_custom_call.1} parent=1 // loop_exit
      _
    %351 = vsyncpa [#allocation3], 1
    %s352 = scalar_lea.sflag [#allocation3], 1
    %353 = vsyncpa %s352, 1
    %354 = vsyncpa [#allocation8], 1
    %s355 = scalar_lea.sflag [#allocation8], 1
    %356 = vsyncpa %s355, 1
    %357 = vsyncpa [#allocation4], 1
    %s358 = scalar_lea.sflag [#allocation4], 1
    %359 = vsyncpa %s358, 1
    %360 = vsyncpa [#allocation11], 1
    %s361 = scalar_lea.sflag [#allocation11], 1
    %362 = vsyncpa %s361, 1
    %363 = vsyncpa [#allocation5], 1
    %s364 = scalar_lea.sflag [#allocation5], 1
    %365 = vsyncpa %s364, 1

</llo_original>
